<compile_context>
chip_gen: v5e
topology: v5e:2x2
jax: 0.10.0
libtpu: 0.0.40
codegen_flags: <defaults>
</compile_context>

<pallas_src>
import functools

import jax
import jax.numpy as jnp
from jax.experimental import pallas as pl
from jax.experimental.pallas import tpu as pltpu

BN_EPS = 1e-5  # torch.nn.BatchNorm2d default


# ----------------------------- kernels ------------------------------------ #

def _stats_kernel(x_ref, w_ref, b_ref, sum_ref, sumsq_ref):
    """Pass 1: accumulate per-channel sum / sum-of-squares of the Linear output.

    x_ref: (C, TILE) slab of the NCHW activation (channels x pixels)
    w_ref: (K_pad, C) padded Linear weight
    b_ref: (K_pad, 1) padded Linear bias
    sum_ref, sumsq_ref: (K_pad, 1) resident accumulators (constant block index)
    """
    @pl.when(jnp.logical_and(pl.program_id(0) == 0, pl.program_id(1) == 0))
    def _init():
        sum_ref[...] = jnp.zeros_like(sum_ref)
        sumsq_ref[...] = jnp.zeros_like(sumsq_ref)

    x = jnp.maximum(x_ref[...], 0.0)                                   # ReLU
    y = jnp.dot(w_ref[...], x, preferred_element_type=jnp.float32)     # (K_pad, TILE)
    y = y + b_ref[...]
    sum_ref[...] += jnp.sum(y, axis=1, keepdims=True)                  # lane reduce (XLU)
    sumsq_ref[...] += jnp.sum(y * y, axis=1, keepdims=True)


def _norm_softmax_kernel(x_ref, w_ref, b_ref, scale_ref, shift_ref,
                         logits_ref, prob_ref, *, k, k_prob):
    """Pass 2: recompute Linear, apply folded BatchNorm, softmax over channels.

    logits_ref: (k, TILE)       -- exact K channels, lane-dense store
    prob_ref:   (k_prob, TILE)  -- exact K-1 channels, lane-dense store
    """
    x = jnp.maximum(x_ref[...], 0.0)                                   # ReLU
    y = jnp.dot(w_ref[...], x, preferred_element_type=jnp.float32)     # (K_pad, TILE)
    y = y + b_ref[...]
    z = y * scale_ref[...] + shift_ref[...]                            # BN (folded)

    # Softmax over the channel (sublane) axis; padded channels sit at -1e30
    # so they contribute exp(.) == 0 to the denominator.
    m = jnp.max(z, axis=0, keepdims=True)
    e = jnp.exp(z - m)
    d = jnp.sum(e, axis=0, keepdims=True)
    inv = pl.reciprocal(d, approx=True)            # EUP slot (otherwise idle)
    inv = inv * (2.0 - d * inv)                    # one Newton step -> ~f32 exact
    p = e * inv

    logits_ref[...] = z[:k, :]                     # drop padded channels at store
    prob_ref[...] = p[:k_prob, :]                  # also drops the "dustbin" channel


# ----------------------------- wrapper ------------------------------------ #

def _pick_spatial_tile(hw, max_tile=2048):
    """Largest multiple of 128 that divides H*W (capped so tiles also fit v7x
    VMEM comfortably); falls back to the full spatial extent."""
    best = None
    t = 128
    while t <= min(max_tile, hw):
        if hw % t == 0:
            best = t
        t += 128
    return best if best is not None else hw


def detector_head(x_nchw, params, cell_size):
    B, C, H, W = x_nchw.shape
    K = cell_size ** 2 + 1
    K_pad = max(8, ((K + 7) // 8) * 8)          # sublane-aligned compute channels
    HW = H * W
    TILE = _pick_spatial_tile(HW)
    nt = HW // TILE
    n_total = B * HW

    # Contiguous (B, C, H*W) view of the NCHW input -- no transpose in HBM.
    x = x_nchw.reshape(B, C, HW).astype(jnp.float32)

    # Channel-padded parameters. Padded channels: zero weight/bias (=> y == 0,
    # finite stats), gamma = 0, beta = -1e30 (=> excluded from the softmax).
    w_pad = jnp.zeros((K_pad, C), jnp.float32).at[:K].set(params['w'])
    b_pad = jnp.zeros((K_pad, 1), jnp.float32).at[:K, 0].set(params['b'])
    gamma_pad = jnp.zeros((K_pad,), jnp.float32).at[:K].set(params['gamma'])
    beta_pad = jnp.full((K_pad,), -1e30, jnp.float32).at[:K].set(params['beta'])

    x_spec = pl.BlockSpec((None, C, TILE), lambda b, j: (b, 0, j))
    w_spec = pl.BlockSpec((K_pad, C), lambda b, j: (0, 0))      # resident, DMA'd once
    vec_spec = pl.BlockSpec((K_pad, 1), lambda b, j: (0, 0))    # resident, DMA'd once

    # ---- Pass 1: global BatchNorm statistics (training mode, biased var). ----
    sums, sumsq = pl.pallas_call(
        _stats_kernel,
        out_shape=(jax.ShapeDtypeStruct((K_pad, 1), jnp.float32),
                   jax.ShapeDtypeStruct((K_pad, 1), jnp.float32)),
        grid=(B, nt),
        in_specs=[x_spec, w_spec, vec_spec],
        out_specs=(vec_spec, vec_spec),
        compiler_params=pltpu.CompilerParams(
            dimension_semantics=("arbitrary", "arbitrary"),   # global reduction
            vmem_limit_bytes=32 * 1024 * 1024),
    )(x, w_pad, b_pad)

    # Fold BN (batch statistics) into per-channel scale/shift (tiny XLA ops).
    # TODO(synk): sum/sumsq accumulation can lose precision for very large N;
    # a Welford / two-level reduction would be more robust at scale.
    mean = sums[:, 0] / n_total
    var = jnp.maximum(sumsq[:, 0] / n_total - mean * mean, 0.0)
    scale = gamma_pad * jax.lax.rsqrt(var + BN_EPS)
    shift = beta_pad - mean * scale

    logits_spec = pl.BlockSpec((None, K, TILE), lambda b, j: (b, 0, j))
    prob_spec = pl.BlockSpec((None, K - 1, TILE), lambda b, j: (b, 0, j))

    # ---- Pass 2: normalize + softmax, exact-K lane-dense stores. ----
    kernel = functools.partial(_norm_softmax_kernel, k=K, k_prob=K - 1)
    logits_flat, prob_flat = pl.pallas_call(
        kernel,
        out_shape=(jax.ShapeDtypeStruct((B, K, HW), jnp.float32),
                   jax.ShapeDtypeStruct((B, K - 1, HW), jnp.float32)),
        grid=(B, nt),
        in_specs=[x_spec, w_spec, vec_spec, vec_spec, vec_spec],
        out_specs=(logits_spec, prob_spec),
        compiler_params=pltpu.CompilerParams(
            dimension_semantics=("parallel", "parallel"),     # megacore sharding
            vmem_limit_bytes=32 * 1024 * 1024),
    )(x, w_pad, b_pad, scale.reshape(K_pad, 1), shift.reshape(K_pad, 1))

    # Logits back to (B, K, H, W): free reshape (output is already channel-major).
    logits = logits_flat.reshape(B, K, H, W)

    # prob: pixel_shuffle(cell_size) then squeeze the channel dim.
    # pixel_shuffle with C_out=1: out[b, h*r+i, w*r+j] = prob[b, i*r+j, h, w].
    # TODO(synk): pixel_shuffle is a pure layout permutation; kept as XLA glue
    # (a small strided transpose) rather than scattering sub-128-lane rows in-kernel.
    r = cell_size
    prob5 = prob_flat.reshape(B, r, r, H, W)                     # [b, i, j, h, w]
    prob = prob5.transpose(0, 3, 1, 4, 2).reshape(B, H * r, W * r)
    return {'logits': logits, 'prob': prob}


# ----------------------------- reference ---------------------------------- #

def _reference(x_nchw, params, cell_size):
    # Pure-JAX reference of the same forward pass, for correctness checking.
    B, C, H, W = x_nchw.shape
    K = cell_size ** 2 + 1
    x = jnp.maximum(x_nchw, 0.0)
    x = jnp.transpose(x, (0, 2, 3, 1))
    y = x @ params['w'].T + params['b']
    y = jnp.transpose(y, (0, 3, 1, 2))                           # (B, K, H, W)
    mean = jnp.mean(y, axis=(0, 2, 3), keepdims=True)
    var = jnp.mean((y - mean) ** 2, axis=(0, 2, 3), keepdims=True)
    z = (y - mean) * jax.lax.rsqrt(var + BN_EPS)
    z = z * params['gamma'].reshape(1, K, 1, 1) + params['beta'].reshape(1, K, 1, 1)
    p = jax.nn.softmax(z, axis=1)[:, :-1]                        # (B, r^2, H, W)
    r = cell_size
    p = p.reshape(B, r, r, H, W).transpose(0, 3, 1, 4, 2).reshape(B, H * r, W * r)
    return {'logits': z, 'prob': p}


if __name__ == "__main__":
    key = jax.random.PRNGKey(0)
    B, C, H, W = 2, 8, 32, 32
    cell_size = 2                      # K = cell_size^2 + 1 = 5
    k1, k2, k3, k4, k5 = jax.random.split(key, 5)

    x = jax.random.normal(k1, (B, C, H, W), jnp.float32)
    K = cell_size ** 2 + 1
    # Deterministic synthetic parameters (no checkpoint load).
    # Note: BatchNorm implemented in training mode (batch statistics), matching
    # a freshly-constructed module; eval mode would use running stats.
    params = {
        'w': 0.1 * jax.random.normal(k2, (K, C), jnp.float32),
        'b': 0.1 * jax.random.normal(k3, (K,), jnp.float32),
        'gamma': 1.0 + 0.1 * jax.random.normal(k4, (K,), jnp.float32),
        'beta': 0.1 * jax.random.normal(k5, (K,), jnp.float32),
    }

    detector = jax.jit(functools.partial(detector_head, cell_size=cell_size))
    out = detector(x, params)
    out = jax.block_until_ready(out)

    ref = _reference(x, params, cell_size)
    assert out['logits'].shape == (B, K, H, W)
    assert out['prob'].shape == (B, H * cell_size, W * cell_size)
    assert jnp.allclose(out['logits'], ref['logits'], atol=1e-4, rtol=1e-4)
    assert jnp.allclose(out['prob'], ref['prob'], atol=1e-4, rtol=1e-4)

    print("KERNEL_OK")
</pallas_src>

<mosaic_0001>
module attributes {stable_mosaic.version = 11 : i64} {
  func.func @_stats_kernel(%arg0: i32, %arg1: i32, %arg2: memref<1x8x1024xf32, #tpu.memory_space<vmem>>, %arg3: memref<8x8xf32, #tpu.memory_space<vmem>>, %arg4: memref<8x1xf32, #tpu.memory_space<vmem>>, %arg5: memref<8x1xf32, #tpu.memory_space<vmem>>, %arg6: memref<8x1xf32, #tpu.memory_space<vmem>>) attributes {dimension_semantics = [#tpu.dimension_semantics<arbitrary>, #tpu.dimension_semantics<arbitrary>], iteration_bounds = array<i64: 2, 1>, scalar_prefetch = 0 : i64, scratch_operands = 0 : i64, tpu.core_type = #tpu.core_type<tc>, window_params = [{transform_indices = @transform_0, window_bounds = array<i64: 1, 8, 1024>}, {pipeline_mode = #tpu.pipeline_mode<synchronous>, transform_indices = @transform_1, window_bounds = array<i64: 8, 8>}, {pipeline_mode = #tpu.pipeline_mode<synchronous>, transform_indices = @transform_2, window_bounds = array<i64: 8, 1>}, {pipeline_mode = #tpu.pipeline_mode<synchronous>, transform_indices = @transform_3, window_bounds = array<i64: 8, 1>}, {pipeline_mode = #tpu.pipeline_mode<synchronous>, transform_indices = @transform_4, window_bounds = array<i64: 8, 1>}]} {
    %c0_i32 = arith.constant 0 : i32
    %0 = arith.cmpi eq, %arg0, %c0_i32 : i32
    %c0_i32_0 = arith.constant 0 : i32
    %1 = arith.cmpi eq, %arg1, %c0_i32_0 : i32
    %2 = arith.andi %0, %1 : i1
    %3 = arith.extui %2 : i1 to i32
    %c0_i32_1 = arith.constant 0 : i32
    %4 = arith.cmpi ne, %3, %c0_i32_1 : i32
    scf.if %4 {
      %cst_19 = arith.constant 0.000000e+00 : f32
      %25 = vector.broadcast %cst_19 : f32 to vector<8x1xf32>
      %c0_20 = arith.constant 0 : index
      %c0_21 = arith.constant 0 : index
      %26 = vector.load %arg5[%c0_20, %c0_21] : memref<8x1xf32, #tpu.memory_space<vmem>>, vector<8x1xf32>
      tpu.vector_store %arg5[%c0_20, %c0_21], %25 {strides = array<i32>} : memref<8x1xf32, #tpu.memory_space<vmem>>, vector<8x1xf32>,
      %cst_22 = arith.constant 0.000000e+00 : f32
      %27 = vector.broadcast %cst_22 : f32 to vector<8x1xf32>
      %c0_23 = arith.constant 0 : index
      %c0_24 = arith.constant 0 : index
      %28 = vector.load %arg6[%c0_23, %c0_24] : memref<8x1xf32, #tpu.memory_space<vmem>>, vector<8x1xf32>
      tpu.vector_store %arg6[%c0_23, %c0_24], %27 {strides = array<i32>} : memref<8x1xf32, #tpu.memory_space<vmem>>, vector<8x1xf32>,
    } else {
    }
    %c0 = arith.constant 0 : index
    %c0_2 = arith.constant 0 : index
    %c0_3 = arith.constant 0 : index
    %5 = vector.load %arg2[%c0, %c0_2, %c0_3] : memref<1x8x1024xf32, #tpu.memory_space<vmem>>, vector<1x8x1024xf32>
    %6 = vector.shape_cast %5 : vector<1x8x1024xf32> to vector<8x1024xf32>
    %cst = arith.constant 0.000000e+00 : f32
    %7 = vector.broadcast %cst : f32 to vector<8x1024xf32>
    %8 = arith.maximumf %6, %7 : vector<8x1024xf32>
    %c0_4 = arith.constant 0 : index
    %c0_5 = arith.constant 0 : index
    %9 = vector.load %arg3[%c0_4, %c0_5] : memref<8x8xf32, #tpu.memory_space<vmem>>, vector<8x8xf32>
    %cst_6 = arith.constant dense<0.000000e+00> : vector<8x1024xf32>
    %10 = tpu.matmul %9, %8, %cst_6 {dimension_numbers = #tpu.dot_dimension_numbers<[1], [0], [0], [1], [0, 0, 1, 1], [], []>} : vector<8x8xf32>, vector<8x1024xf32>, vector<8x1024xf32> -> vector<8x1024xf32>
    %c0_7 = arith.constant 0 : index
    %c0_8 = arith.constant 0 : index
    %11 = vector.load %arg4[%c0_7, %c0_8] : memref<8x1xf32, #tpu.memory_space<vmem>>, vector<8x1xf32>
    %12 = vector.broadcast %11 : vector<8x1xf32> to vector<8x1024xf32>
    %13 = arith.addf %10, %12 : vector<8x1024xf32>
    %c0_9 = arith.constant 0 : index
    %c0_10 = arith.constant 0 : index
    %14 = vector.load %arg5[%c0_9, %c0_10] : memref<8x1xf32, #tpu.memory_space<vmem>>, vector<8x1xf32>
    %cst_11 = arith.constant dense<0.000000e+00> : vector<8xf32>
    %15 = vector.multi_reduction <add>, %13, %cst_11 [1] : vector<8x1024xf32> to vector<8xf32>
    %16 = vector.shape_cast %15 : vector<8xf32> to vector<8x1xf32>
    %17 = arith.addf %14, %16 : vector<8x1xf32>
    %c0_12 = arith.constant 0 : index
    %c0_13 = arith.constant 0 : index
    %18 = vector.load %arg5[%c0_12, %c0_13] : memref<8x1xf32, #tpu.memory_space<vmem>>, vector<8x1xf32>
    tpu.vector_store %arg5[%c0_12, %c0_13], %17 {strides = array<i32>} : memref<8x1xf32, #tpu.memory_space<vmem>>, vector<8x1xf32>,
    %c0_14 = arith.constant 0 : index
    %c0_15 = arith.constant 0 : index
    %19 = vector.load %arg6[%c0_14, %c0_15] : memref<8x1xf32, #tpu.memory_space<vmem>>, vector<8x1xf32>
    %20 = arith.mulf %13, %13 : vector<8x1024xf32>
    %cst_16 = arith.constant dense<0.000000e+00> : vector<8xf32>
    %21 = vector.multi_reduction <add>, %20, %cst_16 [1] : vector<8x1024xf32> to vector<8xf32>
    %22 = vector.shape_cast %21 : vector<8xf32> to vector<8x1xf32>
    %23 = arith.addf %19, %22 : vector<8x1xf32>
    %c0_17 = arith.constant 0 : index
    %c0_18 = arith.constant 0 : index
    %24 = vector.load %arg6[%c0_17, %c0_18] : memref<8x1xf32, #tpu.memory_space<vmem>>, vector<8x1xf32>
    tpu.vector_store %arg6[%c0_17, %c0_18], %23 {strides = array<i32>} : memref<8x1xf32, #tpu.memory_space<vmem>>, vector<8x1xf32>,
    return
  }
  func.func @transform_0(%arg0: i32, %arg1: i32) -> (i32, i32, i32) {
    %c0_i32 = arith.constant 0 : i32
    %c0_i32_0 = arith.constant 0 : i32
    return %arg0, %c0_i32, %arg1 : i32, i32, i32
  }
  func.func @transform_1(%arg0: i32, %arg1: i32) -> (i32, i32) {
    %c0_i32 = arith.constant 0 : i32
    %c0_i32_0 = arith.constant 0 : i32
    %c0_i32_1 = arith.constant 0 : i32
    return %c0_i32, %c0_i32_0 : i32, i32
  }
  func.func @transform_2(%arg0: i32, %arg1: i32) -> (i32, i32) {
    %c0_i32 = arith.constant 0 : i32
    %c0_i32_0 = arith.constant 0 : i32
    %c0_i32_1 = arith.constant 0 : i32
    return %c0_i32, %c0_i32_0 : i32, i32
  }
  func.func @transform_3(%arg0: i32, %arg1: i32) -> (i32, i32) {
    %c0_i32 = arith.constant 0 : i32
    %c0_i32_0 = arith.constant 0 : i32
    %c0_i32_1 = arith.constant 0 : i32
    return %c0_i32, %c0_i32_0 : i32, i32
  }
  func.func @transform_4(%arg0: i32, %arg1: i32) -> (i32, i32) {
    %c0_i32 = arith.constant 0 : i32
    %c0_i32_0 = arith.constant 0 : i32
    %c0_i32_1 = arith.constant 0 : i32
    return %c0_i32, %c0_i32_0 : i32, i32
  }
}

module attributes {stable_mosaic.version = 11 : i64} {
  func.func @_norm_softmax_kernel(%arg0: i32, %arg1: i32, %arg2: memref<1x8x1024xf32, #tpu.memory_space<vmem>>, %arg3: memref<8x8xf32, #tpu.memory_space<vmem>>, %arg4: memref<8x1xf32, #tpu.memory_space<vmem>>, %arg5: memref<8x1xf32, #tpu.memory_space<vmem>>, %arg6: memref<8x1xf32, #tpu.memory_space<vmem>>, %arg7: memref<1x5x1024xf32, #tpu.memory_space<vmem>>, %arg8: memref<1x4x1024xf32, #tpu.memory_space<vmem>>) attributes {dimension_semantics = [#tpu.dimension_semantics<parallel>, #tpu.dimension_semantics<parallel>], iteration_bounds = array<i64: 2, 1>, scalar_prefetch = 0 : i64, scratch_operands = 0 : i64, tpu.core_type = #tpu.core_type<tc>, window_params = [{transform_indices = @transform_0, window_bounds = array<i64: 1, 8, 1024>}, {pipeline_mode = #tpu.pipeline_mode<synchronous>, transform_indices = @transform_1, window_bounds = array<i64: 8, 8>}, {pipeline_mode = #tpu.pipeline_mode<synchronous>, transform_indices = @transform_2, window_bounds = array<i64: 8, 1>}, {pipeline_mode = #tpu.pipeline_mode<synchronous>, transform_indices = @transform_3, window_bounds = array<i64: 8, 1>}, {pipeline_mode = #tpu.pipeline_mode<synchronous>, transform_indices = @transform_4, window_bounds = array<i64: 8, 1>}, {transform_indices = @transform_5, window_bounds = array<i64: 1, 5, 1024>}, {transform_indices = @transform_6, window_bounds = array<i64: 1, 4, 1024>}]} {
    %c0 = arith.constant 0 : index
    %c0_0 = arith.constant 0 : index
    %c0_1 = arith.constant 0 : index
    %0 = vector.load %arg2[%c0, %c0_0, %c0_1] : memref<1x8x1024xf32, #tpu.memory_space<vmem>>, vector<1x8x1024xf32>
    %1 = vector.shape_cast %0 : vector<1x8x1024xf32> to vector<8x1024xf32>
    %cst = arith.constant 0.000000e+00 : f32
    %2 = vector.broadcast %cst : f32 to vector<8x1024xf32>
    %3 = arith.maximumf %1, %2 : vector<8x1024xf32>
    %c0_2 = arith.constant 0 : index
    %c0_3 = arith.constant 0 : index
    %4 = vector.load %arg3[%c0_2, %c0_3] : memref<8x8xf32, #tpu.memory_space<vmem>>, vector<8x8xf32>
    %cst_4 = arith.constant dense<0.000000e+00> : vector<8x1024xf32>
    %5 = tpu.matmul %4, %3, %cst_4 {dimension_numbers = #tpu.dot_dimension_numbers<[1], [0], [0], [1], [0, 0, 1, 1], [], []>} : vector<8x8xf32>, vector<8x1024xf32>, vector<8x1024xf32> -> vector<8x1024xf32>
    %c0_5 = arith.constant 0 : index
    %c0_6 = arith.constant 0 : index
    %6 = vector.load %arg4[%c0_5, %c0_6] : memref<8x1xf32, #tpu.memory_space<vmem>>, vector<8x1xf32>
    %7 = vector.broadcast %6 : vector<8x1xf32> to vector<8x1024xf32>
    %8 = arith.addf %5, %7 : vector<8x1024xf32>
    %c0_7 = arith.constant 0 : index
    %c0_8 = arith.constant 0 : index
    %9 = vector.load %arg5[%c0_7, %c0_8] : memref<8x1xf32, #tpu.memory_space<vmem>>, vector<8x1xf32>
    %10 = vector.broadcast %9 : vector<8x1xf32> to vector<8x1024xf32>
    %11 = arith.mulf %8, %10 : vector<8x1024xf32>
    %c0_9 = arith.constant 0 : index
    %c0_10 = arith.constant 0 : index
    %12 = vector.load %arg6[%c0_9, %c0_10] : memref<8x1xf32, #tpu.memory_space<vmem>>, vector<8x1xf32>
    %13 = vector.broadcast %12 : vector<8x1xf32> to vector<8x1024xf32>
    %14 = arith.addf %11, %13 : vector<8x1024xf32>
    %cst_11 = arith.constant dense<0xFF800000> : vector<1024xf32>
    %15 = vector.multi_reduction <maximumf>, %14, %cst_11 [0] : vector<8x1024xf32> to vector<1024xf32>
    %16 = vector.shape_cast %15 : vector<1024xf32> to vector<1x1024xf32>
    %17 = vector.broadcast %16 : vector<1x1024xf32> to vector<8x1024xf32>
    %18 = arith.subf %14, %17 : vector<8x1024xf32>
    %19 = math.exp %18 : vector<8x1024xf32>
    %cst_12 = arith.constant dense<0.000000e+00> : vector<1024xf32>
    %20 = vector.multi_reduction <add>, %19, %cst_12 [0] : vector<8x1024xf32> to vector<1024xf32>
    %21 = vector.shape_cast %20 : vector<1024xf32> to vector<1x1024xf32>
    %22 = tpu.reciprocal %21 {approx = true} : vector<1x1024xf32> -> vector<1x1024xf32>
    %23 = arith.mulf %21, %22 : vector<1x1024xf32>
    %cst_13 = arith.constant 2.000000e+00 : f32
    %24 = vector.broadcast %cst_13 : f32 to vector<1x1024xf32>
    %25 = arith.subf %24, %23 : vector<1x1024xf32>
    %26 = arith.mulf %22, %25 : vector<1x1024xf32>
    %27 = vector.broadcast %26 : vector<1x1024xf32> to vector<8x1024xf32>
    %28 = arith.mulf %19, %27 : vector<8x1024xf32>
    %29 = vector.extract_strided_slice %14 {offsets = [0, 0], sizes = [5, 1024], strides = [1, 1]} : vector<8x1024xf32> to vector<5x1024xf32>
    %c0_14 = arith.constant 0 : index
    %c0_15 = arith.constant 0 : index
    %c0_16 = arith.constant 0 : index
    %30 = vector.load %arg7[%c0_14, %c0_15, %c0_16] : memref<1x5x1024xf32, #tpu.memory_space<vmem>>, vector<1x5x1024xf32>
    %31 = vector.shape_cast %30 : vector<1x5x1024xf32> to vector<5x1024xf32>
    %32 = vector.shape_cast %29 : vector<5x1024xf32> to vector<1x5x1024xf32>
    tpu.vector_store %arg7[%c0_14, %c0_15, %c0_16], %32 {strides = array<i32>} : memref<1x5x1024xf32, #tpu.memory_space<vmem>>, vector<1x5x1024xf32>,
    %33 = vector.extract_strided_slice %28 {offsets = [0, 0], sizes = [4, 1024], strides = [1, 1]} : vector<8x1024xf32> to vector<4x1024xf32>
    %c0_17 = arith.constant 0 : index
    %c0_18 = arith.constant 0 : index
    %c0_19 = arith.constant 0 : index
    %34 = vector.load %arg8[%c0_17, %c0_18, %c0_19] : memref<1x4x1024xf32, #tpu.memory_space<vmem>>, vector<1x4x1024xf32>
    %35 = vector.shape_cast %34 : vector<1x4x1024xf32> to vector<4x1024xf32>
    %36 = vector.shape_cast %33 : vector<4x1024xf32> to vector<1x4x1024xf32>
    tpu.vector_store %arg8[%c0_17, %c0_18, %c0_19], %36 {strides = array<i32>} : memref<1x4x1024xf32, #tpu.memory_space<vmem>>, vector<1x4x1024xf32>,
    return
  }
  func.func @transform_0(%arg0: i32, %arg1: i32) -> (i32, i32, i32) {
    %c0_i32 = arith.constant 0 : i32
    %c0_i32_0 = arith.constant 0 : i32
    return %arg0, %c0_i32, %arg1 : i32, i32, i32
  }
  func.func @transform_1(%arg0: i32, %arg1: i32) -> (i32, i32) {
    %c0_i32 = arith.constant 0 : i32
    %c0_i32_0 = arith.constant 0 : i32
    %c0_i32_1 = arith.constant 0 : i32
    return %c0_i32, %c0_i32_0 : i32, i32
  }
  func.func @transform_2(%arg0: i32, %arg1: i32) -> (i32, i32) {
    %c0_i32 = arith.constant 0 : i32
    %c0_i32_0 = arith.constant 0 : i32
    %c0_i32_1 = arith.constant 0 : i32
    return %c0_i32, %c0_i32_0 : i32, i32
  }
  func.func @transform_3(%arg0: i32, %arg1: i32) -> (i32, i32) {
    %c0_i32 = arith.constant 0 : i32
    %c0_i32_0 = arith.constant 0 : i32
    %c0_i32_1 = arith.constant 0 : i32
    return %c0_i32, %c0_i32_0 : i32, i32
  }
  func.func @transform_4(%arg0: i32, %arg1: i32) -> (i32, i32) {
    %c0_i32 = arith.constant 0 : i32
    %c0_i32_0 = arith.constant 0 : i32
    %c0_i32_1 = arith.constant 0 : i32
    return %c0_i32, %c0_i32_0 : i32, i32
  }
  func.func @transform_5(%arg0: i32, %arg1: i32) -> (i32, i32, i32) {
    %c0_i32 = arith.constant 0 : i32
    %c0_i32_0 = arith.constant 0 : i32
    return %arg0, %c0_i32, %arg1 : i32, i32, i32
  }
  func.func @transform_6(%arg0: i32, %arg1: i32) -> (i32, i32, i32) {
    %c0_i32 = arith.constant 0 : i32
    %c0_i32_0 = arith.constant 0 : i32
    return %arg0, %c0_i32, %arg1 : i32, i32, i32
  }
}

</mosaic_0001>

<llo_original>
// kernel: detector_head.2
$region0: #{detector_head.2}
  #allocation0 [shape = 'u32[]', space=smem, size = 0x4, offset = 0x4, fixed_abs, tag = 'smem constant byte address 0x4 - core index']
  #allocation1 [shape = 'u32[72,128]{1,0:T(1,128)}', space=vmem, size = 0x9000, scoped, tag = 'internal scratch']
  %s0 = inlined_call_operand.vmem [shape: f32[2,8,1024], index: 0, kind: input, shape index: {}]
  %s1 = inlined_call_operand.vmem [shape: f32[8,8], index: 1, kind: input, shape index: {}]
  %s2 = inlined_call_operand.vmem [shape: f32[8,1], index: 2, kind: input, shape index: {}]
  %s3 = inlined_call_operand.vmem [shape: f32[8,1], index: 3, kind: output, shape index: {0}]
  %s4 = inlined_call_operand.vmem [shape: f32[8,1], index: 4, kind: output, shape index: {1}]
  %5 = xla_tuple %s3, %s4
  %s6 = sld [smem:[#allocation0]]
  $region57: #{detector_head.2} parent=0
    _
  %s8 = ssub.s32 1, %s6
  %s9 = scalar_select 0, %s8, %s6
  loop: start=0, step=1, limit=4
  $region2: #{detector_head.2} parent=0 // loop_pre_header
    _
  $region3: #{detector_head.2} parent=0 // loop_header
    %s11 = sphi 0, %s15
    %p12 = scmp.ge.s32.totalorder %s11, 4
    %s18 = sphi 0, %s30
    %s19 = sphi 0, %s26
    %s20 = sphi 0, %s18
    %s21 = sphi 0, %s19
    %s22 = sphi 0, %s20
    %s23 = sphi 0, %s21
    %s35 = sphi 0, %s37
    %s38 = sphi 0, %s35
    %s39 = sphi 0, %s38
    %s55 = sphi 0, %s39
    %s59 = sphi 0, %s59
    %s61 = sphi 0, %s59
    %s62 = sphi 0, %s61
    %s76 = sphi 0, %s62
    %s80 = sphi 0, %s80
    %s82 = sphi 0, %s80
    %s83 = sphi 0, %s82
    %s97 = sphi 0, %s83
    %s101 = sphi 0, %s101
    %s103 = sphi 0, %s101
    %s104 = sphi 0, %s103
    %s118 = sphi 0, %s104
    %s122 = sphi 0, %s122
    %s124 = sphi 0, %s122
    %s125 = sphi 0, %s124
    %s139 = sphi 0, %s125
  $region4: #{detector_head.2} parent=0 // loop_header_branch
    %14 = sbr.rel (%p12) target = $region8
  $region5: #{detector_head.2} parent=0 // loop_body
    %s16 = ssub.s32 %s11, 1
    %s17 = ssub.s32 %s11, 2
    %s24 = sadd.s32 1, %s19
    %p25 = scmp.ge.s32.totalorder %s24, 1
    %s26 = scalar_select %p25, 0, %s24
    %s27 = sadd.s32 1, %s18
    %s28 = scalar_select %p25, %s27, %s18
    %p29 = scmp.ge.s32.totalorder %s28, 2
    %s30 = scalar_select %p29, 0, %s28
    %s31 = ssub.s32 %s18, %s30
    %s32 = ssub.s32 %s19, %s26
    %s33 = sor.u32 %s31, %s32
    %p34 = scmp.eq.s32.totalorder %s33, 0
    %s36 = sadd.s32 %s35, 1
    %s37 = scalar_select %p34, %s35, %s36
    %p40 = pneg %p34
    %p41 = scmp.eq.s32.totalorder %s11, 1
    %p42 = por %p40, %p41
    %p43 = scmp.ne.s32.totalorder %s35, %s38
    %p44 = scmp.eq.s32.totalorder %s11, 0
    %p45 = por %p43, %p44
    %p46 = scmp.ne.s32.totalorder %s35, %s38
    %p47 = scmp.eq.s32.totalorder %s16, 1
    %p48 = por %p46, %p47
    %p49 = scmp.ne.s32.totalorder %s38, %s39
    %p50 = scmp.eq.s32.totalorder %s16, 0
    %p51 = por %p49, %p50
    %p52 = scmp.ne.s32.totalorder %s38, %s39
    %p53 = scmp.eq.s32.totalorder %s17, 1
    %p54 = por %p52, %p53
    %p56 = scmp.ne.s32.totalorder %s39, %s55
    %p57 = scmp.eq.s32.totalorder %s17, 0
    %p58 = por %p56, %p57
    %s60 = sadd.s32 %s59, 1
    %p63 = scmp.eq.s32.totalorder %s11, 1
    %p64 = scmp.ne.s32.totalorder %s59, %s61
    %p65 = scmp.eq.s32.totalorder %s11, 0
    %p66 = por %p64, %p65
    %p67 = scmp.ne.s32.totalorder %s59, %s61
    %p68 = scmp.eq.s32.totalorder %s16, 1
    %p69 = por %p67, %p68
    %p70 = scmp.ne.s32.totalorder %s61, %s62
    %p71 = scmp.eq.s32.totalorder %s16, 0
    %p72 = por %p70, %p71
    %p73 = scmp.ne.s32.totalorder %s61, %s62
    %p74 = scmp.eq.s32.totalorder %s17, 1
    %p75 = por %p73, %p74
    %p77 = scmp.ne.s32.totalorder %s62, %s76
    %p78 = scmp.eq.s32.totalorder %s17, 0
    %p79 = por %p77, %p78
    %s81 = sadd.s32 %s80, 1
    %p84 = scmp.eq.s32.totalorder %s11, 1
    %p85 = scmp.ne.s32.totalorder %s80, %s82
    %p86 = scmp.eq.s32.totalorder %s11, 0
    %p87 = por %p85, %p86
    %p88 = scmp.ne.s32.totalorder %s80, %s82
    %p89 = scmp.eq.s32.totalorder %s16, 1
    %p90 = por %p88, %p89
    %p91 = scmp.ne.s32.totalorder %s82, %s83
    %p92 = scmp.eq.s32.totalorder %s16, 0
    %p93 = por %p91, %p92
    %p94 = scmp.ne.s32.totalorder %s82, %s83
    %p95 = scmp.eq.s32.totalorder %s17, 1
    %p96 = por %p94, %p95
    %p98 = scmp.ne.s32.totalorder %s83, %s97
    %p99 = scmp.eq.s32.totalorder %s17, 0
    %p100 = por %p98, %p99
    %s102 = sadd.s32 %s101, 1
    %p105 = scmp.eq.s32.totalorder %s11, 1
    %p106 = scmp.ne.s32.totalorder %s101, %s103
    %p107 = scmp.eq.s32.totalorder %s11, 0
    %p108 = por %p106, %p107
    %p109 = scmp.ne.s32.totalorder %s101, %s103
    %p110 = scmp.eq.s32.totalorder %s16, 1
    %p111 = por %p109, %p110
    %p112 = scmp.ne.s32.totalorder %s103, %s104
    %p113 = scmp.eq.s32.totalorder %s16, 0
    %p114 = por %p112, %p113
    %p115 = scmp.ne.s32.totalorder %s103, %s104
    %p116 = scmp.eq.s32.totalorder %s17, 1
    %p117 = por %p115, %p116
    %p119 = scmp.ne.s32.totalorder %s104, %s118
    %p120 = scmp.eq.s32.totalorder %s17, 0
    %p121 = por %p119, %p120
    %s123 = sadd.s32 %s122, 1
    %p126 = scmp.eq.s32.totalorder %s11, 1
    %p127 = scmp.ne.s32.totalorder %s122, %s124
    %p128 = scmp.eq.s32.totalorder %s11, 0
    %p129 = por %p127, %p128
    %p130 = scmp.ne.s32.totalorder %s122, %s124
    %p131 = scmp.eq.s32.totalorder %s16, 1
    %p132 = por %p130, %p131
    %p133 = scmp.ne.s32.totalorder %s124, %s125
    %p134 = scmp.eq.s32.totalorder %s16, 0
    %p135 = por %p133, %p134
    %p136 = scmp.ne.s32.totalorder %s124, %s125
    %p137 = scmp.eq.s32.totalorder %s17, 1
    %p138 = por %p136, %p137
    %p140 = scmp.ne.s32.totalorder %s125, %s139
    %p141 = scmp.eq.s32.totalorder %s17, 0
    %p142 = por %p140, %p141
    %p143 = scmp.le.s32.totalorder 1, %s11
    %p144 = scmp.lt.s32.totalorder %s11, 3
    %p145 = pnand %p143, %p144
    %p146 = pneg %p145
    // Predicated region
    $region9: #{detector_head.2} parent=5 // pred_check
      _
    $region10: #{detector_head.2} parent=5 // pred_check_branch
      %148 = sbr.rel (%p145) target = $region12
    $region11: #{detector_head.2} parent=5 // pred_region
      %s149 = ssub.s32 %s11, 1
      // Predicated region
      $region13: #{detector_head.2} parent=11 // pred_check
        %p150 = pneg %p72
      $region14: #{detector_head.2} parent=11 // pred_check_branch
        %152 = sbr.rel (%p150) target = $region16
      $region15: #{detector_head.2} parent=11 // pred_region
        _
      $region16: #{detector_head.2} parent=11 // pred_fallthru
        _
      // Predicated region
      $region17: #{detector_head.2} parent=11 // pred_check
        %p153 = pneg %p93
      $region18: #{detector_head.2} parent=11 // pred_check_branch
        %155 = sbr.rel (%p153) target = $region20
      $region19: #{detector_head.2} parent=11 // pred_region
        _
      $region20: #{detector_head.2} parent=11 // pred_fallthru
        _
    $region12: #{detector_head.2} parent=5 // pred_fallthru
      _
    %p156 = scmp.lt.s32.totalorder %s11, 2
    // Predicated region
    $region21: #{detector_head.2} parent=5 // pred_check
      %p157 = pneg %p156
    $region22: #{detector_head.2} parent=5 // pred_check_branch
      %159 = sbr.rel (%p157) target = $region24
    $region23: #{detector_head.2} parent=5 // pred_region
      // Predicated region
      $region25: #{detector_head.2} parent=23 // pred_check
        %p160 = pneg %p45
      $region26: #{detector_head.2} parent=23 // pred_check_branch
        %162 = sbr.rel (%p160) target = $region28
      $region27: #{detector_head.2} parent=23 // pred_region
        %s163 = smul.u32 8, %s19
        %p164 = scmp.lt.s32.totalorder %s18, 1
        %s165 = scalar_select %p164, %s18, 1
        %p166 = scmp.lt.s32.totalorder %s163, 7
        %s167 = scalar_select %p166, %s163, 7
        %s168 = smul.addr %s165, 8
        %s169 = sadd.s32 %s167, %s168
        %s170 = smul.addr %s169, 8
        %s171 = scalar_lea.vmem %s0, %s170
        %s172 = smul.u32 8, %s19
      $region28: #{detector_head.2} parent=23 // pred_fallthru
        _
    $region24: #{detector_head.2} parent=5 // pred_fallthru
      _
    %p173 = scmp.le.s32.totalorder 1, %s11
    %p174 = scmp.lt.s32.totalorder %s11, 3
    %p175 = pnand %p173, %p174
    %p176 = pneg %p175
    // Predicated region
    $region29: #{detector_head.2} parent=5 // pred_check
      _
    $region30: #{detector_head.2} parent=5 // pred_check_branch
      %178 = sbr.rel (%p175) target = $region32
    $region31: #{detector_head.2} parent=5 // pred_region
      %s179 = ssub.s32 %s11, 1
      %s180 = smul.u32 8, %s21
      %p181 = scmp.lt.s32.totalorder %s20, 1
      %s182 = scalar_select %p181, %s20, 1
      %p183 = scmp.lt.s32.totalorder %s180, 7
      %s184 = scalar_select %p183, %s180, 7
      %s185 = smul.addr %s182, 8
      %s186 = sadd.s32 %s184, %s185
      %s187 = smul.addr %s186, 8
      %s188 = scalar_lea.vmem %s0, %s187
      %p189 = pneg %p51
      %p190 = pneg %p48
      %p191 = pneg %p72
      %p192 = pneg %p69
      %p193 = pneg %p93
      %p194 = pneg %p90
      %p195 = pneg %p114
      %p196 = pneg %p111
      %p197 = pneg %p135
      %p198 = pneg %p132
      %s199 = smul.u32 8, %s21
      %p200 = scmp.lt.s32.totalorder %s20, 1
      %s201 = scalar_select %p200, %s20, 1
      %p202 = scmp.lt.s32.totalorder %s199, 7
      %s203 = scalar_select %p202, %s199, 7
      %s204 = smul.addr %s201, 8
      %s205 = sadd.s32 %s203, %s204
      %s206 = smul.addr %s205, 8
      %s207 = scalar_lea.vmem %s0, %s206
      %s208 = smul.u32 8, %s21
      %p209 = scmp.eq.s32.totalorder %s20, 0
      %p210 = scmp.eq.s32.totalorder %s21, 0
      %p211 = pnand %p209, %p210
      %p212 = pneg %p211
      // Predicated region
      $region33: #{detector_head.2} parent=31 // pred_check
        _
      $region34: #{detector_head.2} parent=31 // pred_check_branch
        %214 = sbr.rel (%p211) target = $region36
      $region35: #{detector_head.2} parent=31 // pred_region
        %vm215 = vcmask 7168
        %216 = vst.msk [vmem:[%s3] sm:$0xff] %vm215, 0.0
        %217 = vst.msk [vmem:[%s4] sm:$0xff] %vm215, 0.0
      $region36: #{detector_head.2} parent=31 // pred_fallthru
        _
      %v218 = vld [vmem:[%s207] sm:$0xff]
      %v219 = vld [vmem:[%s207 + $0x8] sm:$0xff]
      %v220 = vld [vmem:[%s207 + $0x10] sm:$0xff]
      %v221 = vld [vmem:[%s207 + $0x18] sm:$0xff]
      %v222 = vld [vmem:[%s207 + $0x20] sm:$0xff]
      %v223 = vld [vmem:[%s207 + $0x28] sm:$0xff]
      %v224 = vld [vmem:[%s207 + $0x30] sm:$0xff]
      %v225 = vld [vmem:[%s207 + $0x38] sm:$0xff]
      %v226 = vmax.f32 %v218, 0.0
      %v227 = vmax.f32 %v219, 0.0
      %v228 = vmax.f32 %v220, 0.0
      %v229 = vmax.f32 %v221, 0.0
      %v230 = vmax.f32 %v222, 0.0
      %v231 = vmax.f32 %v223, 0.0
      %v232 = vmax.f32 %v224, 0.0
      %v233 = vmax.f32 %v225, 0.0
      %v234 = vld [vmem:[%s1] sm:$0xff]
      %v235 = vld [vmem:[%s2] sm:$0xff]
      %237 = vset.pattern.permute.xlu0 0
      %238 = vperm.xlu0 %237, %v235
      %v239 = vpop.permute.xlu0 %238
      %vm241 = vcmask 64512
      %v243 = vsel %vm241, %v234, 0
      %245 = vmatpush.msra.mxu0 0.0
      %246 = vmatpush.msra.mxu0 0.0
      %247 = vmatpush.msra.mxu0 0.0
      %248 = vmatpush.msra.mxu0 0.0
      %249 = vmatpush.msra.mxu0 0.0
      %250 = vmatpush.msra.mxu0 0.0
      %251 = vmatpush.msra.mxu0 0.0
      %252 = vmatpush.msra.mxu0 0.0
      %253 = vmatpush.msra.mxu0 0.0
      %254 = vmatpush.msra.mxu0 0.0
      %255 = vmatpush.msra.mxu0 0.0
      %256 = vmatpush.msra.mxu0 0.0
      %257 = vmatpush.msra.mxu0 0.0
      %258 = vmatpush.msra.mxu0 0.0
      %259 = vmatpush.msra.mxu0 0.0
      %260 = vmatpush.msra.mxu0 %v226
      %261 = vmatmul.f32.gmra.mxu0 %v243
      %v262 = vpop.f32.mrf.mxu0
      %v263 = vadd.f32 %v239, %v262
      %264 = vdwg.mxu0
      %265 = vmatpush.msra.mxu0 0.0
      %266 = vmatpush.msra.mxu0 0.0
      %267 = vmatpush.msra.mxu0 0.0
      %268 = vmatpush.msra.mxu0 0.0
      %269 = vmatpush.msra.mxu0 0.0
      %270 = vmatpush.msra.mxu0 0.0
      %271 = vmatpush.msra.mxu0 0.0
      %272 = vmatpush.msra.mxu0 0.0
      %273 = vmatpush.msra.mxu0 0.0
      %274 = vmatpush.msra.mxu0 0.0
      %275 = vmatpush.msra.mxu0 0.0
      %276 = vmatpush.msra.mxu0 0.0
      %277 = vmatpush.msra.mxu0 0.0
      %278 = vmatpush.msra.mxu0 0.0
      %279 = vmatpush.msra.mxu0 0.0
      %280 = vmatpush.msra.mxu0 %v227
      %281 = vmatmul.f32.gmra.mxu0 %v243
      %v282 = vpop.f32.mrf.mxu0
      %v283 = vadd.f32 %v239, %v282
      %284 = vdwg.mxu0
      %285 = vmatpush.msra.mxu0 0.0
      %286 = vmatpush.msra.mxu0 0.0
      %287 = vmatpush.msra.mxu0 0.0
      %288 = vmatpush.msra.mxu0 0.0
      %289 = vmatpush.msra.mxu0 0.0
      %290 = vmatpush.msra.mxu0 0.0
      %291 = vmatpush.msra.mxu0 0.0
      %292 = vmatpush.msra.mxu0 0.0
      %293 = vmatpush.msra.mxu0 0.0
      %294 = vmatpush.msra.mxu0 0.0
      %295 = vmatpush.msra.mxu0 0.0
      %296 = vmatpush.msra.mxu0 0.0
      %297 = vmatpush.msra.mxu0 0.0
      %298 = vmatpush.msra.mxu0 0.0
      %299 = vmatpush.msra.mxu0 0.0
      %300 = vmatpush.msra.mxu0 %v228
      %301 = vmatmul.f32.gmra.mxu0 %v243
      %v302 = vpop.f32.mrf.mxu0
      %v303 = vadd.f32 %v239, %v302
      %304 = vdwg.mxu0
      %305 = vmatpush.msra.mxu0 0.0
      %306 = vmatpush.msra.mxu0 0.0
      %307 = vmatpush.msra.mxu0 0.0
      %308 = vmatpush.msra.mxu0 0.0
      %309 = vmatpush.msra.mxu0 0.0
      %310 = vmatpush.msra.mxu0 0.0
      %311 = vmatpush.msra.mxu0 0.0
      %312 = vmatpush.msra.mxu0 0.0
      %313 = vmatpush.msra.mxu0 0.0
      %314 = vmatpush.msra.mxu0 0.0
      %315 = vmatpush.msra.mxu0 0.0
      %316 = vmatpush.msra.mxu0 0.0
      %317 = vmatpush.msra.mxu0 0.0
      %318 = vmatpush.msra.mxu0 0.0
      %319 = vmatpush.msra.mxu0 0.0
      %320 = vmatpush.msra.mxu0 %v229
      %321 = vmatmul.f32.gmra.mxu0 %v243
      %v322 = vpop.f32.mrf.mxu0
      %v323 = vadd.f32 %v239, %v322
      %324 = vdwg.mxu0
      %325 = vmatpush.msra.mxu0 0.0
      %326 = vmatpush.msra.mxu0 0.0
      %327 = vmatpush.msra.mxu0 0.0
      %328 = vmatpush.msra.mxu0 0.0
      %329 = vmatpush.msra.mxu0 0.0
      %330 = vmatpush.msra.mxu0 0.0
      %331 = vmatpush.msra.mxu0 0.0
      %332 = vmatpush.msra.mxu0 0.0
      %333 = vmatpush.msra.mxu0 0.0
      %334 = vmatpush.msra.mxu0 0.0
      %335 = vmatpush.msra.mxu0 0.0
      %336 = vmatpush.msra.mxu0 0.0
      %337 = vmatpush.msra.mxu0 0.0
      %338 = vmatpush.msra.mxu0 0.0
      %339 = vmatpush.msra.mxu0 0.0
      %340 = vmatpush.msra.mxu0 %v230
      %341 = vmatmul.f32.gmra.mxu0 %v243
      %v342 = vpop.f32.mrf.mxu0
      %v343 = vadd.f32 %v239, %v342
      %344 = vdwg.mxu0
      %345 = vmatpush.msra.mxu0 0.0
      %346 = vmatpush.msra.mxu0 0.0
      %347 = vmatpush.msra.mxu0 0.0
      %348 = vmatpush.msra.mxu0 0.0
      %349 = vmatpush.msra.mxu0 0.0
      %350 = vmatpush.msra.mxu0 0.0
      %351 = vmatpush.msra.mxu0 0.0
      %352 = vmatpush.msra.mxu0 0.0
      %353 = vmatpush.msra.mxu0 0.0
      %354 = vmatpush.msra.mxu0 0.0
      %355 = vmatpush.msra.mxu0 0.0
      %356 = vmatpush.msra.mxu0 0.0
      %357 = vmatpush.msra.mxu0 0.0
      %358 = vmatpush.msra.mxu0 0.0
      %359 = vmatpush.msra.mxu0 0.0
      %360 = vmatpush.msra.mxu0 %v231
      %361 = vmatmul.f32.gmra.mxu0 %v243
      %v362 = vpop.f32.mrf.mxu0
      %v363 = vadd.f32 %v239, %v362
      %364 = vdwg.mxu0
      %365 = vmatpush.msra.mxu0 0.0
      %366 = vmatpush.msra.mxu0 0.0
      %367 = vmatpush.msra.mxu0 0.0
      %368 = vmatpush.msra.mxu0 0.0
      %369 = vmatpush.msra.mxu0 0.0
      %370 = vmatpush.msra.mxu0 0.0
      %371 = vmatpush.msra.mxu0 0.0
      %372 = vmatpush.msra.mxu0 0.0
      %373 = vmatpush.msra.mxu0 0.0
      %374 = vmatpush.msra.mxu0 0.0
      %375 = vmatpush.msra.mxu0 0.0
      %376 = vmatpush.msra.mxu0 0.0
      %377 = vmatpush.msra.mxu0 0.0
      %378 = vmatpush.msra.mxu0 0.0
      %379 = vmatpush.msra.mxu0 0.0
      %380 = vmatpush.msra.mxu0 %v232
      %381 = vmatmul.f32.gmra.mxu0 %v243
      %v382 = vpop.f32.mrf.mxu0
      %v383 = vadd.f32 %v239, %v382
      %384 = vdwg.mxu0
      %385 = vmatpush.msra.mxu0 0.0
      %386 = vmatpush.msra.mxu0 0.0
      %387 = vmatpush.msra.mxu0 0.0
      %388 = vmatpush.msra.mxu0 0.0
      %389 = vmatpush.msra.mxu0 0.0
      %390 = vmatpush.msra.mxu0 0.0
      %391 = vmatpush.msra.mxu0 0.0
      %392 = vmatpush.msra.mxu0 0.0
      %393 = vmatpush.msra.mxu0 0.0
      %394 = vmatpush.msra.mxu0 0.0
      %395 = vmatpush.msra.mxu0 0.0
      %396 = vmatpush.msra.mxu0 0.0
      %397 = vmatpush.msra.mxu0 0.0
      %398 = vmatpush.msra.mxu0 0.0
      %399 = vmatpush.msra.mxu0 0.0
      %400 = vmatpush.msra.mxu0 %v233
      %401 = vmatmul.f32.gmra.mxu0 %v243
      %v402 = vpop.f32.mrf.mxu0
      %v403 = vadd.f32 %v239, %v402
      %404 = vdwg.mxu0
      %v405 = vld [vmem:[%s3] sm:$0xff]
      %v406 = vadd.f32 %v263, %v283
      %v407 = vadd.f32 %v406, %v303
      %v408 = vadd.f32 %v407, %v323
      %v409 = vadd.f32 %v408, %v343
      %v410 = vadd.f32 %v409, %v363
      %v411 = vadd.f32 %v410, %v383
      %v412 = vadd.f32 %v411, %v403
      %413 = vadd.xlane.f32.xlu0 %v412
      %v414 = vpop.xlane.xlu0 %413
      %v415 = vadd.f32 %v405, %v414
      %vm416 = vcmask 7168
      %417 = vst.msk [vmem:[%s3] sm:$0xff] %vm416, %v415
      %v418 = vld [vmem:[%s4] sm:$0xff]
      %v419 = vmul.f32 %v263, %v263
      %v420 = vmul.f32 %v283, %v283
      %v421 = vmul.f32 %v303, %v303
      %v422 = vmul.f32 %v323, %v323
      %v423 = vmul.f32 %v343, %v343
      %v424 = vmul.f32 %v363, %v363
      %v425 = vmul.f32 %v383, %v383
      %v426 = vmul.f32 %v403, %v403
      %v427 = vadd.f32 %v419, %v420
      %v428 = vadd.f32 %v427, %v421
      %v429 = vadd.f32 %v428, %v422
      %v430 = vadd.f32 %v429, %v423
      %v431 = vadd.f32 %v430, %v424
      %v432 = vadd.f32 %v431, %v425
      %v433 = vadd.f32 %v432, %v426
      %434 = vadd.xlane.f32.xlu0 %v433
      %v435 = vpop.xlane.xlu0 %434
      %v436 = vadd.f32 %v418, %v435
      %437 = vst.msk [vmem:[%s4] sm:$0xff] %vm416, %v436
      // Predicated region
      $region37: #{detector_head.2} parent=31 // pred_check
        %p438 = pneg %p111
      $region38: #{detector_head.2} parent=31 // pred_check_branch
        %440 = sbr.rel (%p438) target = $region40
      $region39: #{detector_head.2} parent=31 // pred_region
        _
      $region40: #{detector_head.2} parent=31 // pred_fallthru
        _
      // Predicated region
      $region41: #{detector_head.2} parent=31 // pred_check
        %p441 = pneg %p132
      $region42: #{detector_head.2} parent=31 // pred_check_branch
        %443 = sbr.rel (%p441) target = $region44
      $region43: #{detector_head.2} parent=31 // pred_region
        _
      $region44: #{detector_head.2} parent=31 // pred_fallthru
        _
      // Predicated region
      $region45: #{detector_head.2} parent=31 // pred_check
        %p444 = pneg %p111
      $region46: #{detector_head.2} parent=31 // pred_check_branch
        %446 = sbr.rel (%p444) target = $region48
      $region47: #{detector_head.2} parent=31 // pred_region
        _
      $region48: #{detector_head.2} parent=31 // pred_fallthru
        _
      // Predicated region
      $region49: #{detector_head.2} parent=31 // pred_check
        %p447 = pneg %p132
      $region50: #{detector_head.2} parent=31 // pred_check_branch
        %449 = sbr.rel (%p447) target = $region52
      $region51: #{detector_head.2} parent=31 // pred_region
        _
      $region52: #{detector_head.2} parent=31 // pred_fallthru
        _
    $region32: #{detector_head.2} parent=5 // pred_fallthru
      _
    %p450 = scmp.le.s32.totalorder 2, %s11
    // Predicated region
    $region53: #{detector_head.2} parent=5 // pred_check
      %p451 = pneg %p450
    $region54: #{detector_head.2} parent=5 // pred_check_branch
      %453 = sbr.rel (%p451) target = $region56
    $region55: #{detector_head.2} parent=5 // pred_region
      %s454 = ssub.s32 %s11, 2
    $region56: #{detector_head.2} parent=5 // pred_fallthru
      _
  $region6: #{detector_head.2} parent=0 // loop_footer
    %s15 = sadd.s32 1, %s11
  $region7: #{detector_head.2} parent=0 // loop_footer_branch
    %10 = sbr.rel target = $region3
  $region8: #{detector_head.2} parent=0 // loop_exit
    _

// kernel: detector_head.3
$region0: #{detector_head.3}
  #allocation0 [shape = 'u32[]', space=smem, size = 0x4, offset = 0x4, fixed_abs, tag = 'smem constant byte address 0x4 - core index']
  #allocation1 [shape = 'u32[72,128]{1,0:T(1,128)}', space=vmem, size = 0x9000, scoped, tag = 'internal scratch']
  %s0 = inlined_call_operand.vmem [shape: f32[2,8,1024], index: 0, kind: input, shape index: {}]
  %s1 = inlined_call_operand.vmem [shape: f32[8,8], index: 1, kind: input, shape index: {}]
  %s2 = inlined_call_operand.vmem [shape: f32[8,1], index: 2, kind: input, shape index: {}]
  %s3 = inlined_call_operand.vmem [shape: f32[8,1], index: 3, kind: input, shape index: {}]
  %s4 = inlined_call_operand.vmem [shape: f32[8,1], index: 4, kind: input, shape index: {}]
  %s5 = inlined_call_operand.vmem [shape: f32[2,5,1024], index: 5, kind: output, shape index: {0}]
  %s6 = inlined_call_operand.vmem [shape: f32[2,4,1024], index: 6, kind: output, shape index: {1}]
  %7 = xla_tuple %s5, %s6
  %s8 = sld [smem:[#allocation0]]
  $region61: #{detector_head.3} parent=0
    _
  %s10 = ssub.s32 1, %s8
  %s11 = scalar_select 0, %s10, %s8
  loop: start=0, step=1, limit=4
  $region2: #{detector_head.3} parent=0 // loop_pre_header
    _
  $region3: #{detector_head.3} parent=0 // loop_header
    %s13 = sphi 0, %s17
    %p14 = scmp.ge.s32.totalorder %s13, 4
    %s20 = sphi 0, %s32
    %s21 = sphi 0, %s28
    %s22 = sphi 0, %s20
    %s23 = sphi 0, %s21
    %s24 = sphi 0, %s22
    %s25 = sphi 0, %s23
    %s37 = sphi 0, %s39
    %s40 = sphi 0, %s37
    %s41 = sphi 0, %s40
    %s57 = sphi 0, %s41
    %s61 = sphi 0, %s61
    %s63 = sphi 0, %s61
    %s64 = sphi 0, %s63
    %s78 = sphi 0, %s64
    %s82 = sphi 0, %s82
    %s84 = sphi 0, %s82
    %s85 = sphi 0, %s84
    %s99 = sphi 0, %s85
    %s103 = sphi 0, %s103
    %s105 = sphi 0, %s103
    %s106 = sphi 0, %s105
    %s120 = sphi 0, %s106
    %s124 = sphi 0, %s124
    %s126 = sphi 0, %s124
    %s127 = sphi 0, %s126
    %s141 = sphi 0, %s127
    %s149 = sphi 0, %s151
    %s152 = sphi 0, %s149
    %s153 = sphi 0, %s152
    %s169 = sphi 0, %s153
    %s177 = sphi 0, %s179
    %s180 = sphi 0, %s177
    %s181 = sphi 0, %s180
    %s197 = sphi 0, %s181
  $region4: #{detector_head.3} parent=0 // loop_header_branch
    %16 = sbr.rel (%p14) target = $region8
  $region5: #{detector_head.3} parent=0 // loop_body
    %s18 = ssub.s32 %s13, 1
    %s19 = ssub.s32 %s13, 2
    %s26 = sadd.s32 1, %s21
    %p27 = scmp.ge.s32.totalorder %s26, 1
    %s28 = scalar_select %p27, 0, %s26
    %s29 = sadd.s32 1, %s20
    %s30 = scalar_select %p27, %s29, %s20
    %p31 = scmp.ge.s32.totalorder %s30, 2
    %s32 = scalar_select %p31, 0, %s30
    %s33 = ssub.s32 %s20, %s32
    %s34 = ssub.s32 %s21, %s28
    %s35 = sor.u32 %s33, %s34
    %p36 = scmp.eq.s32.totalorder %s35, 0
    %s38 = sadd.s32 %s37, 1
    %s39 = scalar_select %p36, %s37, %s38
    %p42 = pneg %p36
    %p43 = scmp.eq.s32.totalorder %s13, 1
    %p44 = por %p42, %p43
    %p45 = scmp.ne.s32.totalorder %s37, %s40
    %p46 = scmp.eq.s32.totalorder %s13, 0
    %p47 = por %p45, %p46
    %p48 = scmp.ne.s32.totalorder %s37, %s40
    %p49 = scmp.eq.s32.totalorder %s18, 1
    %p50 = por %p48, %p49
    %p51 = scmp.ne.s32.totalorder %s40, %s41
    %p52 = scmp.eq.s32.totalorder %s18, 0
    %p53 = por %p51, %p52
    %p54 = scmp.ne.s32.totalorder %s40, %s41
    %p55 = scmp.eq.s32.totalorder %s19, 1
    %p56 = por %p54, %p55
    %p58 = scmp.ne.s32.totalorder %s41, %s57
    %p59 = scmp.eq.s32.totalorder %s19, 0
    %p60 = por %p58, %p59
    %s62 = sadd.s32 %s61, 1
    %p65 = scmp.eq.s32.totalorder %s13, 1
    %p66 = scmp.ne.s32.totalorder %s61, %s63
    %p67 = scmp.eq.s32.totalorder %s13, 0
    %p68 = por %p66, %p67
    %p69 = scmp.ne.s32.totalorder %s61, %s63
    %p70 = scmp.eq.s32.totalorder %s18, 1
    %p71 = por %p69, %p70
    %p72 = scmp.ne.s32.totalorder %s63, %s64
    %p73 = scmp.eq.s32.totalorder %s18, 0
    %p74 = por %p72, %p73
    %p75 = scmp.ne.s32.totalorder %s63, %s64
    %p76 = scmp.eq.s32.totalorder %s19, 1
    %p77 = por %p75, %p76
    %p79 = scmp.ne.s32.totalorder %s64, %s78
    %p80 = scmp.eq.s32.totalorder %s19, 0
    %p81 = por %p79, %p80
    %s83 = sadd.s32 %s82, 1
    %p86 = scmp.eq.s32.totalorder %s13, 1
    %p87 = scmp.ne.s32.totalorder %s82, %s84
    %p88 = scmp.eq.s32.totalorder %s13, 0
    %p89 = por %p87, %p88
    %p90 = scmp.ne.s32.totalorder %s82, %s84
    %p91 = scmp.eq.s32.totalorder %s18, 1
    %p92 = por %p90, %p91
    %p93 = scmp.ne.s32.totalorder %s84, %s85
    %p94 = scmp.eq.s32.totalorder %s18, 0
    %p95 = por %p93, %p94
    %p96 = scmp.ne.s32.totalorder %s84, %s85
    %p97 = scmp.eq.s32.totalorder %s19, 1
    %p98 = por %p96, %p97
    %p100 = scmp.ne.s32.totalorder %s85, %s99
    %p101 = scmp.eq.s32.totalorder %s19, 0
    %p102 = por %p100, %p101
    %s104 = sadd.s32 %s103, 1
    %p107 = scmp.eq.s32.totalorder %s13, 1
    %p108 = scmp.ne.s32.totalorder %s103, %s105
    %p109 = scmp.eq.s32.totalorder %s13, 0
    %p110 = por %p108, %p109
    %p111 = scmp.ne.s32.totalorder %s103, %s105
    %p112 = scmp.eq.s32.totalorder %s18, 1
    %p113 = por %p111, %p112
    %p114 = scmp.ne.s32.totalorder %s105, %s106
    %p115 = scmp.eq.s32.totalorder %s18, 0
    %p116 = por %p114, %p115
    %p117 = scmp.ne.s32.totalorder %s105, %s106
    %p118 = scmp.eq.s32.totalorder %s19, 1
    %p119 = por %p117, %p118
    %p121 = scmp.ne.s32.totalorder %s106, %s120
    %p122 = scmp.eq.s32.totalorder %s19, 0
    %p123 = por %p121, %p122
    %s125 = sadd.s32 %s124, 1
    %p128 = scmp.eq.s32.totalorder %s13, 1
    %p129 = scmp.ne.s32.totalorder %s124, %s126
    %p130 = scmp.eq.s32.totalorder %s13, 0
    %p131 = por %p129, %p130
    %p132 = scmp.ne.s32.totalorder %s124, %s126
    %p133 = scmp.eq.s32.totalorder %s18, 1
    %p134 = por %p132, %p133
    %p135 = scmp.ne.s32.totalorder %s126, %s127
    %p136 = scmp.eq.s32.totalorder %s18, 0
    %p137 = por %p135, %p136
    %p138 = scmp.ne.s32.totalorder %s126, %s127
    %p139 = scmp.eq.s32.totalorder %s19, 1
    %p140 = por %p138, %p139
    %p142 = scmp.ne.s32.totalorder %s127, %s141
    %p143 = scmp.eq.s32.totalorder %s19, 0
    %p144 = por %p142, %p143
    %s145 = ssub.s32 %s20, %s32
    %s146 = ssub.s32 %s21, %s28
    %s147 = sor.u32 %s145, %s146
    %p148 = scmp.eq.s32.totalorder %s147, 0
    %s150 = sadd.s32 %s149, 1
    %s151 = scalar_select %p148, %s149, %s150
    %p154 = pneg %p148
    %p155 = scmp.eq.s32.totalorder %s13, 1
    %p156 = por %p154, %p155
    %p157 = scmp.ne.s32.totalorder %s149, %s152
    %p158 = scmp.eq.s32.totalorder %s13, 0
    %p159 = por %p157, %p158
    %p160 = scmp.ne.s32.totalorder %s149, %s152
    %p161 = scmp.eq.s32.totalorder %s18, 1
    %p162 = por %p160, %p161
    %p163 = scmp.ne.s32.totalorder %s152, %s153
    %p164 = scmp.eq.s32.totalorder %s18, 0
    %p165 = por %p163, %p164
    %p166 = scmp.ne.s32.totalorder %s152, %s153
    %p167 = scmp.eq.s32.totalorder %s19, 1
    %p168 = por %p166, %p167
    %p170 = scmp.ne.s32.totalorder %s153, %s169
    %p171 = scmp.eq.s32.totalorder %s19, 0
    %p172 = por %p170, %p171
    %s173 = ssub.s32 %s20, %s32
    %s174 = ssub.s32 %s21, %s28
    %s175 = sor.u32 %s173, %s174
    %p176 = scmp.eq.s32.totalorder %s175, 0
    %s178 = sadd.s32 %s177, 1
    %s179 = scalar_select %p176, %s177, %s178
    %p182 = pneg %p176
    %p183 = scmp.eq.s32.totalorder %s13, 1
    %p184 = por %p182, %p183
    %p185 = scmp.ne.s32.totalorder %s177, %s180
    %p186 = scmp.eq.s32.totalorder %s13, 0
    %p187 = por %p185, %p186
    %p188 = scmp.ne.s32.totalorder %s177, %s180
    %p189 = scmp.eq.s32.totalorder %s18, 1
    %p190 = por %p188, %p189
    %p191 = scmp.ne.s32.totalorder %s180, %s181
    %p192 = scmp.eq.s32.totalorder %s18, 0
    %p193 = por %p191, %p192
    %p194 = scmp.ne.s32.totalorder %s180, %s181
    %p195 = scmp.eq.s32.totalorder %s19, 1
    %p196 = por %p194, %p195
    %p198 = scmp.ne.s32.totalorder %s181, %s197
    %p199 = scmp.eq.s32.totalorder %s19, 0
    %p200 = por %p198, %p199
    %p201 = scmp.le.s32.totalorder 1, %s13
    %p202 = scmp.lt.s32.totalorder %s13, 3
    %p203 = pnand %p201, %p202
    %p204 = pneg %p203
    // Predicated region
    $region9: #{detector_head.3} parent=5 // pred_check
      _
    $region10: #{detector_head.3} parent=5 // pred_check_branch
      %206 = sbr.rel (%p203) target = $region12
    $region11: #{detector_head.3} parent=5 // pred_region
      %s207 = ssub.s32 %s13, 1
      // Predicated region
      $region13: #{detector_head.3} parent=11 // pred_check
        %p208 = pneg %p74
      $region14: #{detector_head.3} parent=11 // pred_check_branch
        %210 = sbr.rel (%p208) target = $region16
      $region15: #{detector_head.3} parent=11 // pred_region
        _
      $region16: #{detector_head.3} parent=11 // pred_fallthru
        _
      // Predicated region
      $region17: #{detector_head.3} parent=11 // pred_check
        %p211 = pneg %p95
      $region18: #{detector_head.3} parent=11 // pred_check_branch
        %213 = sbr.rel (%p211) target = $region20
      $region19: #{detector_head.3} parent=11 // pred_region
        _
      $region20: #{detector_head.3} parent=11 // pred_fallthru
        _
      // Predicated region
      $region21: #{detector_head.3} parent=11 // pred_check
        %p214 = pneg %p116
      $region22: #{detector_head.3} parent=11 // pred_check_branch
        %216 = sbr.rel (%p214) target = $region24
      $region23: #{detector_head.3} parent=11 // pred_region
        _
      $region24: #{detector_head.3} parent=11 // pred_fallthru
        _
      // Predicated region
      $region25: #{detector_head.3} parent=11 // pred_check
        %p217 = pneg %p137
      $region26: #{detector_head.3} parent=11 // pred_check_branch
        %219 = sbr.rel (%p217) target = $region28
      $region27: #{detector_head.3} parent=11 // pred_region
        _
      $region28: #{detector_head.3} parent=11 // pred_fallthru
        _
    $region12: #{detector_head.3} parent=5 // pred_fallthru
      _
    %p220 = scmp.lt.s32.totalorder %s13, 2
    // Predicated region
    $region29: #{detector_head.3} parent=5 // pred_check
      %p221 = pneg %p220
    $region30: #{detector_head.3} parent=5 // pred_check_branch
      %223 = sbr.rel (%p221) target = $region32
    $region31: #{detector_head.3} parent=5 // pred_region
      // Predicated region
      $region33: #{detector_head.3} parent=31 // pred_check
        %p224 = pneg %p47
      $region34: #{detector_head.3} parent=31 // pred_check_branch
        %226 = sbr.rel (%p224) target = $region36
      $region35: #{detector_head.3} parent=31 // pred_region
        %s227 = smul.u32 8, %s21
        %p228 = scmp.lt.s32.totalorder %s20, 1
        %s229 = scalar_select %p228, %s20, 1
        %p230 = scmp.lt.s32.totalorder %s227, 7
        %s231 = scalar_select %p230, %s227, 7
        %s232 = smul.addr %s229, 8
        %s233 = sadd.s32 %s231, %s232
        %s234 = smul.addr %s233, 8
        %s235 = scalar_lea.vmem %s0, %s234
        %s236 = smul.u32 8, %s21
      $region36: #{detector_head.3} parent=31 // pred_fallthru
        _
    $region32: #{detector_head.3} parent=5 // pred_fallthru
      _
    %p237 = scmp.le.s32.totalorder 1, %s13
    %p238 = scmp.lt.s32.totalorder %s13, 3
    %p239 = pnand %p237, %p238
    %p240 = pneg %p239
    // Predicated region
    $region37: #{detector_head.3} parent=5 // pred_check
      _
    $region38: #{detector_head.3} parent=5 // pred_check_branch
      %242 = sbr.rel (%p239) target = $region40
    $region39: #{detector_head.3} parent=5 // pred_region
      %s243 = ssub.s32 %s13, 1
      %s244 = smul.u32 8, %s23
      %p245 = scmp.lt.s32.totalorder %s22, 1
      %s246 = scalar_select %p245, %s22, 1
      %p247 = scmp.lt.s32.totalorder %s244, 7
      %s248 = scalar_select %p247, %s244, 7
      %s249 = smul.addr %s246, 8
      %s250 = sadd.s32 %s248, %s249
      %s251 = smul.addr %s250, 8
      %s252 = scalar_lea.vmem %s0, %s251
      %p253 = pneg %p53
      %p254 = pneg %p50
      %p255 = pneg %p74
      %p256 = pneg %p71
      %p257 = pneg %p95
      %p258 = pneg %p92
      %p259 = pneg %p116
      %p260 = pneg %p113
      %p261 = pneg %p137
      %p262 = pneg %p134
      %p263 = pneg %p165
      %p264 = pneg %p162
      %s265 = smul.u32 8, %s23
      %p266 = scmp.lt.s32.totalorder %s22, 1
      %s267 = scalar_select %p266, %s22, 1
      %p268 = scmp.lt.s32.totalorder %s265, 7
      %s269 = scalar_select %p268, %s265, 7
      %s270 = smul.addr %s267, 8
      %s271 = sadd.s32 %s269, %s270
      %s272 = smul.addr %s271, 8
      %s273 = scalar_lea.vmem %s5, %s272
      %p274 = pneg %p193
      %p275 = pneg %p190
      %s276 = smul.u32 8, %s23
      %p277 = scmp.lt.s32.totalorder %s22, 1
      %s278 = scalar_select %p277, %s22, 1
      %p279 = scmp.lt.s32.totalorder %s276, 7
      %s280 = scalar_select %p279, %s276, 7
      %s281 = smul.addr %s278, 8
      %s282 = sadd.s32 %s280, %s281
      %s283 = smul.addr %s282, 4
      %s284 = scalar_lea.vmem %s6, %s283
      %s285 = smul.u32 8, %s23
      %p286 = scmp.lt.s32.totalorder %s22, 1
      %s287 = scalar_select %p286, %s22, 1
      %p288 = scmp.lt.s32.totalorder %s285, 7
      %s289 = scalar_select %p288, %s285, 7
      %s290 = smul.addr %s287, 8
      %s291 = sadd.s32 %s289, %s290
      %s292 = smul.addr %s291, 8
      %s293 = scalar_lea.vmem %s0, %s292
      %s294 = smul.u32 8, %s23
      %s295 = smul.u32 8, %s23
      %p296 = scmp.lt.s32.totalorder %s22, 1
      %s297 = scalar_select %p296, %s22, 1
      %p298 = scmp.lt.s32.totalorder %s295, 7
      %s299 = scalar_select %p298, %s295, 7
      %s300 = smul.addr %s297, 8
      %s301 = sadd.s32 %s299, %s300
      %s302 = smul.addr %s301, 8
      %s303 = scalar_lea.vmem %s5, %s302
      %s304 = smul.u32 8, %s23
      %s305 = smul.u32 8, %s23
      %p306 = scmp.lt.s32.totalorder %s22, 1
      %s307 = scalar_select %p306, %s22, 1
      %p308 = scmp.lt.s32.totalorder %s305, 7
      %s309 = scalar_select %p308, %s305, 7
      %s310 = smul.addr %s307, 8
      %s311 = sadd.s32 %s309, %s310
      %s312 = smul.addr %s311, 4
      %s313 = scalar_lea.vmem %s6, %s312
      %s314 = smul.u32 8, %s23
      %v315 = vld [vmem:[%s293] sm:$0xff]
      %v316 = vld [vmem:[%s293 + $0x8] sm:$0xff]
      %v317 = vld [vmem:[%s293 + $0x10] sm:$0xff]
      %v318 = vld [vmem:[%s293 + $0x18] sm:$0xff]
      %v319 = vld [vmem:[%s293 + $0x20] sm:$0xff]
      %v320 = vld [vmem:[%s293 + $0x28] sm:$0xff]
      %v321 = vld [vmem:[%s293 + $0x30] sm:$0xff]
      %v322 = vld [vmem:[%s293 + $0x38] sm:$0xff]
      %v323 = vmax.f32 %v315, 0.0
      %v324 = vmax.f32 %v316, 0.0
      %v325 = vmax.f32 %v317, 0.0
      %v326 = vmax.f32 %v318, 0.0
      %v327 = vmax.f32 %v319, 0.0
      %v328 = vmax.f32 %v320, 0.0
      %v329 = vmax.f32 %v321, 0.0
      %v330 = vmax.f32 %v322, 0.0
      %v331 = vld [vmem:[%s1] sm:$0xff]
      %v332 = vld [vmem:[%s2] sm:$0xff]
      %334 = vset.pattern.permute.xlu0 0
      %335 = vperm.xlu0 %334, %v332
      %v336 = vpop.permute.xlu0 %335
      %vm338 = vcmask 64512
      %v340 = vsel %vm338, %v331, 0
      %342 = vmatpush.msra.mxu0 0.0
      %343 = vmatpush.msra.mxu0 0.0
      %344 = vmatpush.msra.mxu0 0.0
      %345 = vmatpush.msra.mxu0 0.0
      %346 = vmatpush.msra.mxu0 0.0
      %347 = vmatpush.msra.mxu0 0.0
      %348 = vmatpush.msra.mxu0 0.0
      %349 = vmatpush.msra.mxu0 0.0
      %350 = vmatpush.msra.mxu0 0.0
      %351 = vmatpush.msra.mxu0 0.0
      %352 = vmatpush.msra.mxu0 0.0
      %353 = vmatpush.msra.mxu0 0.0
      %354 = vmatpush.msra.mxu0 0.0
      %355 = vmatpush.msra.mxu0 0.0
      %356 = vmatpush.msra.mxu0 0.0
      %357 = vmatpush.msra.mxu0 %v323
      %358 = vmatmul.f32.gmra.mxu0 %v340
      %v359 = vpop.f32.mrf.mxu0
      %v360 = vadd.f32 %v336, %v359
      %361 = vdwg.mxu0
      %362 = vmatpush.msra.mxu0 0.0
      %363 = vmatpush.msra.mxu0 0.0
      %364 = vmatpush.msra.mxu0 0.0
      %365 = vmatpush.msra.mxu0 0.0
      %366 = vmatpush.msra.mxu0 0.0
      %367 = vmatpush.msra.mxu0 0.0
      %368 = vmatpush.msra.mxu0 0.0
      %369 = vmatpush.msra.mxu0 0.0
      %370 = vmatpush.msra.mxu0 0.0
      %371 = vmatpush.msra.mxu0 0.0
      %372 = vmatpush.msra.mxu0 0.0
      %373 = vmatpush.msra.mxu0 0.0
      %374 = vmatpush.msra.mxu0 0.0
      %375 = vmatpush.msra.mxu0 0.0
      %376 = vmatpush.msra.mxu0 0.0
      %377 = vmatpush.msra.mxu0 %v324
      %378 = vmatmul.f32.gmra.mxu0 %v340
      %v379 = vpop.f32.mrf.mxu0
      %v380 = vadd.f32 %v336, %v379
      %381 = vdwg.mxu0
      %382 = vmatpush.msra.mxu0 0.0
      %383 = vmatpush.msra.mxu0 0.0
      %384 = vmatpush.msra.mxu0 0.0
      %385 = vmatpush.msra.mxu0 0.0
      %386 = vmatpush.msra.mxu0 0.0
      %387 = vmatpush.msra.mxu0 0.0
      %388 = vmatpush.msra.mxu0 0.0
      %389 = vmatpush.msra.mxu0 0.0
      %390 = vmatpush.msra.mxu0 0.0
      %391 = vmatpush.msra.mxu0 0.0
      %392 = vmatpush.msra.mxu0 0.0
      %393 = vmatpush.msra.mxu0 0.0
      %394 = vmatpush.msra.mxu0 0.0
      %395 = vmatpush.msra.mxu0 0.0
      %396 = vmatpush.msra.mxu0 0.0
      %397 = vmatpush.msra.mxu0 %v325
      %398 = vmatmul.f32.gmra.mxu0 %v340
      %v399 = vpop.f32.mrf.mxu0
      %v400 = vadd.f32 %v336, %v399
      %401 = vdwg.mxu0
      %402 = vmatpush.msra.mxu0 0.0
      %403 = vmatpush.msra.mxu0 0.0
      %404 = vmatpush.msra.mxu0 0.0
      %405 = vmatpush.msra.mxu0 0.0
      %406 = vmatpush.msra.mxu0 0.0
      %407 = vmatpush.msra.mxu0 0.0
      %408 = vmatpush.msra.mxu0 0.0
      %409 = vmatpush.msra.mxu0 0.0
      %410 = vmatpush.msra.mxu0 0.0
      %411 = vmatpush.msra.mxu0 0.0
      %412 = vmatpush.msra.mxu0 0.0
      %413 = vmatpush.msra.mxu0 0.0
      %414 = vmatpush.msra.mxu0 0.0
      %415 = vmatpush.msra.mxu0 0.0
      %416 = vmatpush.msra.mxu0 0.0
      %417 = vmatpush.msra.mxu0 %v326
      %418 = vmatmul.f32.gmra.mxu0 %v340
      %v419 = vpop.f32.mrf.mxu0
      %v420 = vadd.f32 %v336, %v419
      %421 = vdwg.mxu0
      %422 = vmatpush.msra.mxu0 0.0
      %423 = vmatpush.msra.mxu0 0.0
      %424 = vmatpush.msra.mxu0 0.0
      %425 = vmatpush.msra.mxu0 0.0
      %426 = vmatpush.msra.mxu0 0.0
      %427 = vmatpush.msra.mxu0 0.0
      %428 = vmatpush.msra.mxu0 0.0
      %429 = vmatpush.msra.mxu0 0.0
      %430 = vmatpush.msra.mxu0 0.0
      %431 = vmatpush.msra.mxu0 0.0
      %432 = vmatpush.msra.mxu0 0.0
      %433 = vmatpush.msra.mxu0 0.0
      %434 = vmatpush.msra.mxu0 0.0
      %435 = vmatpush.msra.mxu0 0.0
      %436 = vmatpush.msra.mxu0 0.0
      %437 = vmatpush.msra.mxu0 %v327
      %438 = vmatmul.f32.gmra.mxu0 %v340
      %v439 = vpop.f32.mrf.mxu0
      %v440 = vadd.f32 %v336, %v439
      %441 = vdwg.mxu0
      %442 = vmatpush.msra.mxu0 0.0
      %443 = vmatpush.msra.mxu0 0.0
      %444 = vmatpush.msra.mxu0 0.0
      %445 = vmatpush.msra.mxu0 0.0
      %446 = vmatpush.msra.mxu0 0.0
      %447 = vmatpush.msra.mxu0 0.0
      %448 = vmatpush.msra.mxu0 0.0
      %449 = vmatpush.msra.mxu0 0.0
      %450 = vmatpush.msra.mxu0 0.0
      %451 = vmatpush.msra.mxu0 0.0
      %452 = vmatpush.msra.mxu0 0.0
      %453 = vmatpush.msra.mxu0 0.0
      %454 = vmatpush.msra.mxu0 0.0
      %455 = vmatpush.msra.mxu0 0.0
      %456 = vmatpush.msra.mxu0 0.0
      %457 = vmatpush.msra.mxu0 %v328
      %458 = vmatmul.f32.gmra.mxu0 %v340
      %v459 = vpop.f32.mrf.mxu0
      %v460 = vadd.f32 %v336, %v459
      %461 = vdwg.mxu0
      %462 = vmatpush.msra.mxu0 0.0
      %463 = vmatpush.msra.mxu0 0.0
      %464 = vmatpush.msra.mxu0 0.0
      %465 = vmatpush.msra.mxu0 0.0
      %466 = vmatpush.msra.mxu0 0.0
      %467 = vmatpush.msra.mxu0 0.0
      %468 = vmatpush.msra.mxu0 0.0
      %469 = vmatpush.msra.mxu0 0.0
      %470 = vmatpush.msra.mxu0 0.0
      %471 = vmatpush.msra.mxu0 0.0
      %472 = vmatpush.msra.mxu0 0.0
      %473 = vmatpush.msra.mxu0 0.0
      %474 = vmatpush.msra.mxu0 0.0
      %475 = vmatpush.msra.mxu0 0.0
      %476 = vmatpush.msra.mxu0 0.0
      %477 = vmatpush.msra.mxu0 %v329
      %478 = vmatmul.f32.gmra.mxu0 %v340
      %v479 = vpop.f32.mrf.mxu0
      %v480 = vadd.f32 %v336, %v479
      %481 = vdwg.mxu0
      %482 = vmatpush.msra.mxu0 0.0
      %483 = vmatpush.msra.mxu0 0.0
      %484 = vmatpush.msra.mxu0 0.0
      %485 = vmatpush.msra.mxu0 0.0
      %486 = vmatpush.msra.mxu0 0.0
      %487 = vmatpush.msra.mxu0 0.0
      %488 = vmatpush.msra.mxu0 0.0
      %489 = vmatpush.msra.mxu0 0.0
      %490 = vmatpush.msra.mxu0 0.0
      %491 = vmatpush.msra.mxu0 0.0
      %492 = vmatpush.msra.mxu0 0.0
      %493 = vmatpush.msra.mxu0 0.0
      %494 = vmatpush.msra.mxu0 0.0
      %495 = vmatpush.msra.mxu0 0.0
      %496 = vmatpush.msra.mxu0 0.0
      %497 = vmatpush.msra.mxu0 %v330
      %498 = vmatmul.f32.gmra.mxu0 %v340
      %v499 = vpop.f32.mrf.mxu0
      %v500 = vadd.f32 %v336, %v499
      %501 = vdwg.mxu0
      %v502 = vld [vmem:[%s3] sm:$0xff]
      %504 = vset.pattern.permute.xlu0 0
      %505 = vperm.xlu0 %504, %v502
      %v506 = vpop.permute.xlu0 %505
      %v508 = vmul.f32 %v360, %v506
      %v509 = vmul.f32 %v380, %v506
      %v510 = vmul.f32 %v400, %v506
      %v511 = vmul.f32 %v420, %v506
      %v512 = vmul.f32 %v440, %v506
      %v513 = vmul.f32 %v460, %v506
      %v514 = vmul.f32 %v480, %v506
      %v515 = vmul.f32 %v500, %v506
      %v516 = vld [vmem:[%s4] sm:$0xff]
      %518 = vset.pattern.permute.xlu0 0
      %519 = vperm.xlu0 %518, %v516
      %v520 = vpop.permute.xlu0 %519
      %v522 = vadd.f32 %v508, %v520
      %v523 = vadd.f32 %v509, %v520
      %v524 = vadd.f32 %v510, %v520
      %v525 = vadd.f32 %v511, %v520
      %v526 = vadd.f32 %v512, %v520
      %v527 = vadd.f32 %v513, %v520
      %v528 = vadd.f32 %v514, %v520
      %v529 = vadd.f32 %v515, %v520
      %v530 = vrot.slane %v522, 4
      %v531 = vmax.f32 %v522, %v530
      %v532 = vrot.slane %v531, 2
      %v533 = vmax.f32 %v531, %v532
      %v534 = vrot.slane %v533, 1
      %v535 = vmax.f32 %v533, %v534
      %v536 = vrot.slane %v523, 4
      %v537 = vmax.f32 %v523, %v536
      %v538 = vrot.slane %v537, 2
      %v539 = vmax.f32 %v537, %v538
      %v540 = vrot.slane %v539, 1
      %v541 = vmax.f32 %v539, %v540
      %v542 = vrot.slane %v524, 4
      %v543 = vmax.f32 %v524, %v542
      %v544 = vrot.slane %v543, 2
      %v545 = vmax.f32 %v543, %v544
      %v546 = vrot.slane %v545, 1
      %v547 = vmax.f32 %v545, %v546
      %v548 = vrot.slane %v525, 4
      %v549 = vmax.f32 %v525, %v548
      %v550 = vrot.slane %v549, 2
      %v551 = vmax.f32 %v549, %v550
      %v552 = vrot.slane %v551, 1
      %v553 = vmax.f32 %v551, %v552
      %v554 = vrot.slane %v526, 4
      %v555 = vmax.f32 %v526, %v554
      %v556 = vrot.slane %v555, 2
      %v557 = vmax.f32 %v555, %v556
      %v558 = vrot.slane %v557, 1
      %v559 = vmax.f32 %v557, %v558
      %v560 = vrot.slane %v527, 4
      %v561 = vmax.f32 %v527, %v560
      %v562 = vrot.slane %v561, 2
      %v563 = vmax.f32 %v561, %v562
      %v564 = vrot.slane %v563, 1
      %v565 = vmax.f32 %v563, %v564
      %v566 = vrot.slane %v528, 4
      %v567 = vmax.f32 %v528, %v566
      %v568 = vrot.slane %v567, 2
      %v569 = vmax.f32 %v567, %v568
      %v570 = vrot.slane %v569, 1
      %v571 = vmax.f32 %v569, %v570
      %v572 = vrot.slane %v529, 4
      %v573 = vmax.f32 %v529, %v572
      %v574 = vrot.slane %v573, 2
      %v575 = vmax.f32 %v573, %v574
      %v576 = vrot.slane %v575, 1
      %v577 = vmax.f32 %v575, %v576
      %v578 = vsub.f32 %v522, %v535
      %v579 = vsub.f32 %v523, %v541
      %v580 = vsub.f32 %v524, %v547
      %v581 = vsub.f32 %v525, %v553
      %v582 = vsub.f32 %v526, %v559
      %v583 = vsub.f32 %v527, %v565
      %v584 = vsub.f32 %v528, %v571
      %v585 = vsub.f32 %v529, %v577
      %v586 = vmul.f32 %v578, 1.442695
      %v587 = vpow.pop %v586
      %v588 = vmul.f32 %v579, 1.442695
      %v589 = vpow.pop %v588
      %v590 = vmul.f32 %v580, 1.442695
      %v591 = vpow.pop %v590
      %v592 = vmul.f32 %v581, 1.442695
      %v593 = vpow.pop %v592
      %v594 = vmul.f32 %v582, 1.442695
      %v595 = vpow.pop %v594
      %v596 = vmul.f32 %v583, 1.442695
      %v597 = vpow.pop %v596
      %v598 = vmul.f32 %v584, 1.442695
      %v599 = vpow.pop %v598
      %v600 = vmul.f32 %v585, 1.442695
      %v601 = vpow.pop %v600
      %v602 = vrot.slane %v587, 4
      %v603 = vadd.f32 %v587, %v602
      %v604 = vrot.slane %v603, 2
      %v605 = vadd.f32 %v603, %v604
      %v606 = vrot.slane %v605, 1
      %v607 = vadd.f32 %v605, %v606
      %v608 = vrot.slane %v589, 4
      %v609 = vadd.f32 %v589, %v608
      %v610 = vrot.slane %v609, 2
      %v611 = vadd.f32 %v609, %v610
      %v612 = vrot.slane %v611, 1
      %v613 = vadd.f32 %v611, %v612
      %v614 = vrot.slane %v591, 4
      %v615 = vadd.f32 %v591, %v614
      %v616 = vrot.slane %v615, 2
      %v617 = vadd.f32 %v615, %v616
      %v618 = vrot.slane %v617, 1
      %v619 = vadd.f32 %v617, %v618
      %v620 = vrot.slane %v593, 4
      %v621 = vadd.f32 %v593, %v620
      %v622 = vrot.slane %v621, 2
      %v623 = vadd.f32 %v621, %v622
      %v624 = vrot.slane %v623, 1
      %v625 = vadd.f32 %v623, %v624
      %v626 = vrot.slane %v595, 4
      %v627 = vadd.f32 %v595, %v626
      %v628 = vrot.slane %v627, 2
      %v629 = vadd.f32 %v627, %v628
      %v630 = vrot.slane %v629, 1
      %v631 = vadd.f32 %v629, %v630
      %v632 = vrot.slane %v597, 4
      %v633 = vadd.f32 %v597, %v632
      %v634 = vrot.slane %v633, 2
      %v635 = vadd.f32 %v633, %v634
      %v636 = vrot.slane %v635, 1
      %v637 = vadd.f32 %v635, %v636
      %v638 = vrot.slane %v599, 4
      %v639 = vadd.f32 %v599, %v638
      %v640 = vrot.slane %v639, 2
      %v641 = vadd.f32 %v639, %v640
      %v642 = vrot.slane %v641, 1
      %v643 = vadd.f32 %v641, %v642
      %v644 = vrot.slane %v601, 4
      %v645 = vadd.f32 %v601, %v644
      %v646 = vrot.slane %v645, 2
      %v647 = vadd.f32 %v645, %v646
      %v648 = vrot.slane %v647, 1
      %v649 = vadd.f32 %v647, %v648
      %v650 = vrcp.pop %v607
      %v651 = vrcp.pop %v613
      %v652 = vrcp.pop %v619
      %v653 = vrcp.pop %v625
      %v654 = vrcp.pop %v631
      %v655 = vrcp.pop %v637
      %v656 = vrcp.pop %v643
      %v657 = vrcp.pop %v649
      %v658 = vmul.f32 %v607, %v650
      %v659 = vmul.f32 %v613, %v651
      %v660 = vmul.f32 %v619, %v652
      %v661 = vmul.f32 %v625, %v653
      %v662 = vmul.f32 %v631, %v654
      %v663 = vmul.f32 %v637, %v655
      %v664 = vmul.f32 %v643, %v656
      %v665 = vmul.f32 %v649, %v657
      %v666 = vsub.f32 2.0, %v658
      %v667 = vsub.f32 2.0, %v659
      %v668 = vsub.f32 2.0, %v660
      %v669 = vsub.f32 2.0, %v661
      %v670 = vsub.f32 2.0, %v662
      %v671 = vsub.f32 2.0, %v663
      %v672 = vsub.f32 2.0, %v664
      %v673 = vsub.f32 2.0, %v665
      %v674 = vmul.f32 %v650, %v666
      %v675 = vmul.f32 %v651, %v667
      %v676 = vmul.f32 %v652, %v668
      %v677 = vmul.f32 %v653, %v669
      %v678 = vmul.f32 %v654, %v670
      %v679 = vmul.f32 %v655, %v671
      %v680 = vmul.f32 %v656, %v672
      %v681 = vmul.f32 %v657, %v673
      %v682 = vmul.f32 %v587, %v674
      %v683 = vmul.f32 %v589, %v675
      %v684 = vmul.f32 %v591, %v676
      %v685 = vmul.f32 %v593, %v677
      %v686 = vmul.f32 %v595, %v678
      %v687 = vmul.f32 %v597, %v679
      %v688 = vmul.f32 %v599, %v680
      %v689 = vmul.f32 %v601, %v681
      %690 = vst [vmem:[%s303] sm:$0x1f] %v522
      %691 = vst [vmem:[%s303 + $0x8] sm:$0x1f] %v523
      %692 = vst [vmem:[%s303 + $0x10] sm:$0x1f] %v524
      %693 = vst [vmem:[%s303 + $0x18] sm:$0x1f] %v525
      %694 = vst [vmem:[%s303 + $0x20] sm:$0x1f] %v526
      %695 = vst [vmem:[%s303 + $0x28] sm:$0x1f] %v527
      %696 = vst [vmem:[%s303 + $0x30] sm:$0x1f] %v528
      %697 = vst [vmem:[%s303 + $0x38] sm:$0x1f] %v529
      %v706 = vrot.slane %v683, 4
      %v707 = vrot.slane %v685, 4
      %v708 = vrot.slane %v687, 4
      %v709 = vrot.slane %v689, 4
      %vm710 = vcmask 1043456
      %v711 = vsel %vm710, %v682, %v706
      %v712 = vsel %vm710, %v684, %v707
      %v713 = vsel %vm710, %v686, %v708
      %v714 = vsel %vm710, %v688, %v709
      %719 = vst [vmem:[%s313] sm:$0xff] %v711
      %720 = vst [vmem:[%s313 + $0x8] sm:$0xff] %v712
      %721 = vst [vmem:[%s313 + $0x10] sm:$0xff] %v713
      %722 = vst [vmem:[%s313 + $0x18] sm:$0xff] %v714
      %s723 = smul.u32 8, %s23
      %p724 = scmp.lt.s32.totalorder %s22, 1
      %s725 = scalar_select %p724, %s22, 1
      %p726 = scmp.lt.s32.totalorder %s723, 7
      %s727 = scalar_select %p726, %s723, 7
      %s728 = smul.addr %s725, 8
      %s729 = sadd.s32 %s727, %s728
      %s730 = smul.addr %s729, 8
      %s731 = scalar_lea.vmem %s5, %s730
      %s732 = smul.u32 8, %s23
      %p733 = scmp.lt.s32.totalorder %s22, 1
      %s734 = scalar_select %p733, %s22, 1
      %p735 = scmp.lt.s32.totalorder %s732, 7
      %s736 = scalar_select %p735, %s732, 7
      %s737 = smul.addr %s734, 8
      %s738 = sadd.s32 %s736, %s737
      %s739 = smul.addr %s738, 4
      %s740 = scalar_lea.vmem %s6, %s739
      // Predicated region
      $region41: #{detector_head.3} parent=39 // pred_check
        %p741 = pneg %p162
      $region42: #{detector_head.3} parent=39 // pred_check_branch
        %743 = sbr.rel (%p741) target = $region44
      $region43: #{detector_head.3} parent=39 // pred_region
        %s744 = smul.u32 8, %s23
      $region44: #{detector_head.3} parent=39 // pred_fallthru
        _
      // Predicated region
      $region45: #{detector_head.3} parent=39 // pred_check
        %p745 = pneg %p190
      $region46: #{detector_head.3} parent=39 // pred_check_branch
        %747 = sbr.rel (%p745) target = $region48
      $region47: #{detector_head.3} parent=39 // pred_region
        %s748 = smul.u32 8, %s23
      $region48: #{detector_head.3} parent=39 // pred_fallthru
        _
    $region40: #{detector_head.3} parent=5 // pred_fallthru
      _
    %p749 = scmp.le.s32.totalorder 2, %s13
    // Predicated region
    $region49: #{detector_head.3} parent=5 // pred_check
      %p750 = pneg %p749
    $region50: #{detector_head.3} parent=5 // pred_check_branch
      %752 = sbr.rel (%p750) target = $region52
    $region51: #{detector_head.3} parent=5 // pred_region
      %s753 = ssub.s32 %s13, 2
      // Predicated region
      $region53: #{detector_head.3} parent=51 // pred_check
        %p754 = pneg %p168
      $region54: #{detector_head.3} parent=51 // pred_check_branch
        %756 = sbr.rel (%p754) target = $region56
      $region55: #{detector_head.3} parent=51 // pred_region
        %s757 = smul.u32 8, %s25
        %p758 = scmp.lt.s32.totalorder %s24, 1
        %s759 = scalar_select %p758, %s24, 1
        %p760 = scmp.lt.s32.totalorder %s757, 7
        %s761 = scalar_select %p760, %s757, 7
        %s762 = smul.addr %s759, 8
        %s763 = sadd.s32 %s761, %s762
        %s764 = smul.addr %s763, 8
        %s765 = scalar_lea.vmem %s5, %s764
      $region56: #{detector_head.3} parent=51 // pred_fallthru
        _
      // Predicated region
      $region57: #{detector_head.3} parent=51 // pred_check
        %p766 = pneg %p196
      $region58: #{detector_head.3} parent=51 // pred_check_branch
        %768 = sbr.rel (%p766) target = $region60
      $region59: #{detector_head.3} parent=51 // pred_region
        %s769 = smul.u32 8, %s25
        %p770 = scmp.lt.s32.totalorder %s24, 1
        %s771 = scalar_select %p770, %s24, 1
        %p772 = scmp.lt.s32.totalorder %s769, 7
        %s773 = scalar_select %p772, %s769, 7
        %s774 = smul.addr %s771, 8
        %s775 = sadd.s32 %s773, %s774
        %s776 = smul.addr %s775, 4
        %s777 = scalar_lea.vmem %s6, %s776
      $region60: #{detector_head.3} parent=51 // pred_fallthru
        _
    $region52: #{detector_head.3} parent=5 // pred_fallthru
      _
  $region6: #{detector_head.3} parent=0 // loop_footer
    %s17 = sadd.s32 1, %s13
  $region7: #{detector_head.3} parent=0 // loop_footer_branch
    %12 = sbr.rel target = $region3
  $region8: #{detector_head.3} parent=0 // loop_exit
    _

</llo_original>
